<compile_context>
chip_gen: v7x
topology: tpu7x:2x2x1
jax: 0.10.0
libtpu: 0.0.40
codegen_flags: <defaults>
</compile_context>

<pallas_src>
import functools

import jax
import jax.numpy as jnp
from jax.experimental import pallas as pl
from jax.experimental.pallas import tpu as pltpu


def _spatial_transformer_kernel(src_ref, flow_ref, out_ref, *, H, W, T):
    """One (batch, output-tile) grid step.

    src_ref : (1, C, HW)  full source image for this batch element (VMEM resident)
    flow_ref: (1, 2, T)   flow for this output tile (row 0 = dy, row 1 = dx)
    out_ref : (1, C, T)   output tile
    """
    src = src_ref[0]                        # (C, HW) f32
    flow2d = flow_ref[0]                    # (2, T)  f32
    flow_y = flow2d[0:1, :]                 # (1, T)
    flow_x = flow2d[1:2, :]                 # (1, T)

    t = pl.program_id(1)
    # global flattened output-pixel index for this tile (exact for HW < 2**24)
    p = (t * T + jax.lax.broadcasted_iota(jnp.int32, (1, T), 1)).astype(jnp.float32)
    base_y = jnp.floor(p / W)
    base_x = p - base_y * W

    # fused: 2*(loc/(size-1)-0.5) followed by align_corners=False un-normalization
    #        ((g+1)*size - 1)/2  ==  loc * size/(size-1) - 0.5
    sy = H / (H - 1.0)
    sx = W / (W - 1.0)
    iy = (base_y + flow_y) * sy - 0.5       # (1, T)
    ix = (base_x + flow_x) * sx - 0.5       # (1, T)

    y0 = jnp.floor(iy)
    x0 = jnp.floor(ix)
    wy1 = iy - y0
    wx1 = ix - x0

    def axis_weights(c0, w1, size):
        """(size, T) per-axis weighted one-hot: corner c0 gets (1-w1), c0+1 gets w1;
        out-of-range corners are zero-weighted (grid_sample zeros padding)."""
        c1 = c0 + 1.0
        w0 = 1.0 - w1
        hi = size - 1.0
        v0 = (c0 >= 0.0) & (c0 <= hi)
        v1 = (c1 >= 0.0) & (c1 <= hi)
        w0 = jnp.where(v0, w0, 0.0)                               # (1, T)
        w1 = jnp.where(v1, w1, 0.0)                               # (1, T)
        i0 = jnp.clip(c0, 0.0, hi).astype(jnp.int32)              # (1, T)
        i1 = jnp.clip(c1, 0.0, hi).astype(jnp.int32)              # (1, T)
        iota = jax.lax.broadcasted_iota(jnp.int32, (size, T), 0)  # (size, T)
        return jnp.where(iota == i0, w0, 0.0) + jnp.where(iota == i1, w1, 0.0)

    ry = axis_weights(y0, wy1, H)           # (H, T)
    cx = axis_weights(x0, wx1, W)           # (W, T)

    # Separable outer product -> full sampling matrix, built in one fused expression
    # (single materialization, no scratch read-modify-write).
    s_t = (ry[:, None, :] * cx[None, :, :]).reshape(H * W, T)     # (HW, T)

    out = jnp.dot(src, s_t, preferred_element_type=jnp.float32)   # (C, T)
    out_ref[0] = out.astype(out_ref.dtype)


def _vmem_capacity_bytes():
    try:
        return int(pltpu.get_tpu_info().vmem_capacity_bytes)
    except Exception:
        return 128 << 20  # conservative default: v5e/v6e-class part


def _budgets():
    """(tile scratch budget, vmem_limit cap, vmem_limit floor) — generation-aware."""
    cap = _vmem_capacity_bytes()
    if cap <= (96 << 20):                       # v7x class: 64 MiB per TensorCore
        return 18 << 20, 40 << 20, 24 << 20
    return 56 << 20, 96 << 20, 32 << 20         # v5e / v6e: 128 MiB


def _pick_tile(HW, tile_budget):
    """Largest lane-dense output tile dividing HW whose ~3 f32 (HW,T) temporaries fit."""
    for cand in (512, 256, 128):
        if HW % cand == 0 and 12 * HW * cand <= tile_budget:
            return cand
    if HW % 128 == 0:
        return 128
    return HW  # full extent (block equals array dim, so (8,128) rule is satisfied)


def spatial_transformer(src, flow, *, t_out=None):
    """src: (N, C, H, W) f32, flow: (N, 2, H, W) f32 (dy, dx) -> (N, C, H, W) f32."""
    N, C, H, W = src.shape
    assert flow.shape == (N, 2, H, W)
    assert H > 1 and W > 1, "degenerate spatial dims (H==1 or W==1) are unsupported"
    HW = H * W
    assert HW < (1 << 24), "f32 flattened-index recovery needs H*W < 2**24"

    tile_budget, vmem_cap, vmem_floor = _budgets()
    if t_out is None:
        t_out = _pick_tile(HW, tile_budget)
    assert HW % t_out == 0
    num_t = HW // t_out

    src_f = src.reshape(N, C, HW).astype(jnp.float32)
    flow_f = flow.reshape(N, 2, HW).astype(jnp.float32)

    kernel = functools.partial(_spatial_transformer_kernel, H=H, W=W, T=t_out)

    # src index_map ignores the tile axis -> single buffer is enough when the block
    # is large (only re-fetched at batch boundaries); frees C*HW*4 bytes of VMEM.
    src_block_bytes = C * HW * 4
    src_single_buffer = src_block_bytes > (4 << 20)
    src_bufs = 1 if src_single_buffer else 2

    est = (12 * HW * t_out                  # ~3 f32 (HW, T) temporaries for s_t build
           + src_bufs * src_block_bytes     # src block
           + 2 * 2 * t_out * 4              # flow block (double-buffered)
           + 2 * C * t_out * 4)             # out block (double-buffered)
    vmem_limit = int(min(max(1.5 * est, vmem_floor), vmem_cap))

    src_spec_kwargs = {}
    if src_single_buffer:
        src_spec_kwargs["pipeline_mode"] = pl.Buffered(1)

    cost = pl.CostEstimate(
        flops=int(N * (2 * C * HW * HW        # matmul
                       + 3 * HW * HW          # s_t outer product + stores
                       + 8 * (H + W) * HW)),  # per-axis weight build
        transcendentals=0,
        bytes_accessed=int(N * (C * HW + 2 * HW + C * HW) * 4),
    )

    out = pl.pallas_call(
        kernel,
        out_shape=jax.ShapeDtypeStruct((N, C, HW), jnp.float32),
        grid_spec=pltpu.PrefetchScalarGridSpec(
            num_scalar_prefetch=0,
            grid=(N, num_t),
            in_specs=[
                pl.BlockSpec((1, C, HW), lambda n, t: (n, 0, 0),       # full src, resident
                             **src_spec_kwargs),
                pl.BlockSpec((1, 2, t_out), lambda n, t: (n, 0, t)),   # flow tile
            ],
            out_specs=pl.BlockSpec((1, C, t_out), lambda n, t: (n, 0, t)),
        ),
        compiler_params=pltpu.CompilerParams(
            dimension_semantics=("parallel", "parallel"),
            vmem_limit_bytes=vmem_limit,
        ),
        cost_estimate=cost,
    )(src_f, flow_f)
    return out.reshape(N, C, H, W)


def _reference(src, flow):
    """Pure-JAX reference matching torch semantics (bilinear, zeros, align_corners=False)."""
    N, C, H, W = src.shape
    yy = jnp.arange(H, dtype=jnp.float32).reshape(1, H, 1)
    xx = jnp.arange(W, dtype=jnp.float32).reshape(1, 1, W)
    y_loc = yy + flow[:, 0]
    x_loc = xx + flow[:, 1]
    gy = 2.0 * (y_loc / (H - 1) - 0.5)
    gx = 2.0 * (x_loc / (W - 1) - 0.5)
    iy = ((gy + 1.0) * H - 1.0) * 0.5
    ix = ((gx + 1.0) * W - 1.0) * 0.5
    y0 = jnp.floor(iy)
    x0 = jnp.floor(ix)
    out = jnp.zeros((N, C, H, W), jnp.float32)
    for dy in (0, 1):
        for dx in (0, 1):
            cy = y0 + dy
            cx = x0 + dx
            wy = (iy - y0) if dy == 1 else (1.0 - (iy - y0))
            wx = (ix - x0) if dx == 1 else (1.0 - (ix - x0))
            w = wy * wx
            valid = (cy >= 0) & (cy <= H - 1) & (cx >= 0) & (cx <= W - 1)
            w = jnp.where(valid, w, 0.0)
            cyi = jnp.clip(cy, 0, H - 1).astype(jnp.int32)
            cxi = jnp.clip(cx, 0, W - 1).astype(jnp.int32)
            vals = jax.vmap(lambda s, y, x: s[:, y, x])(src, cyi, cxi)
            out = out + w[:, None] * vals
    return out


if __name__ == "__main__":
    key = jax.random.PRNGKey(0)
    k1, k2 = jax.random.split(key)
    N, C, H, W = 2, 4, 16, 16
    src = jax.random.normal(k1, (N, C, H, W), dtype=jnp.float32)
    flow = 2.0 * jax.random.normal(k2, (N, 2, H, W), dtype=jnp.float32)

    ref = _reference(src, flow)

    # default (auto-selected) tile
    out = jax.block_until_ready(spatial_transformer(src, flow))
    assert out.shape == (N, C, H, W)
    assert jnp.allclose(out, ref, atol=1e-4, rtol=1e-4), "mismatch vs reference (auto tile)"

    # explicit smaller tile: exercises the tiled (multi-step) output-pixel grid axis
    out_tiled = jax.block_until_ready(spatial_transformer(src, flow, t_out=128))
    assert jnp.allclose(out_tiled, ref, atol=1e-4, rtol=1e-4), "mismatch vs reference (t_out=128)"

    print("KERNEL_OK")
</pallas_src>

<mosaic_0001>
module attributes {stable_mosaic.version = 11 : i64} {
  func.func @_spatial_transformer_kernel(%arg0: i32, %arg1: i32, %arg2: memref<1x4x256xf32, #tpu.memory_space<vmem>>, %arg3: memref<1x2x256xf32, #tpu.memory_space<vmem>>, %arg4: memref<1x4x256xf32, #tpu.memory_space<vmem>>) attributes {dimension_semantics = [#tpu.dimension_semantics<parallel>, #tpu.dimension_semantics<parallel>], iteration_bounds = array<i64: 2, 1>, scalar_prefetch = 0 : i64, scratch_operands = 0 : i64, tpu.core_type = #tpu.core_type<tc>, window_params = [{transform_indices = @transform_0, window_bounds = array<i64: 1, 4, 256>}, {transform_indices = @transform_1, window_bounds = array<i64: 1, 2, 256>}, {transform_indices = @transform_2, window_bounds = array<i64: 1, 4, 256>}]} {
    %c0 = arith.constant 0 : index
    %c0_0 = arith.constant 0 : index
    %c0_1 = arith.constant 0 : index
    %0 = vector.load %arg2[%c0, %c0_0, %c0_1] : memref<1x4x256xf32, #tpu.memory_space<vmem>>, vector<1x4x256xf32>
    %1 = vector.shape_cast %0 : vector<1x4x256xf32> to vector<4x256xf32>
    %c0_2 = arith.constant 0 : index
    %c0_3 = arith.constant 0 : index
    %c0_4 = arith.constant 0 : index
    %2 = vector.load %arg3[%c0_2, %c0_3, %c0_4] : memref<1x2x256xf32, #tpu.memory_space<vmem>>, vector<1x2x256xf32>
    %3 = vector.shape_cast %2 : vector<1x2x256xf32> to vector<2x256xf32>
    %4 = vector.extract_strided_slice %3 {offsets = [0, 0], sizes = [1, 256], strides = [1, 1]} : vector<2x256xf32> to vector<1x256xf32>
    %5 = vector.extract_strided_slice %3 {offsets = [1, 0], sizes = [1, 256], strides = [1, 1]} : vector<2x256xf32> to vector<1x256xf32>
    %c256_i32 = arith.constant 256 : i32
    %6 = arith.muli %arg1, %c256_i32 : i32
    %7 = tpu.iota {dimensions = array<i32: 1>} : vector<1x256xi32>
    %8 = vector.broadcast %6 : i32 to vector<1x256xi32>
    %9 = arith.addi %8, %7 : vector<1x256xi32>
    %10 = arith.sitofp %9 : vector<1x256xi32> to vector<1x256xf32>
    %cst = arith.constant 1.600000e+01 : f32
    %11 = vector.broadcast %cst : f32 to vector<1x256xf32>
    %12 = arith.divf %10, %11 : vector<1x256xf32>
    %13 = math.floor %12 : vector<1x256xf32>
    %cst_5 = arith.constant 1.600000e+01 : f32
    %14 = vector.broadcast %cst_5 : f32 to vector<1x256xf32>
    %15 = arith.mulf %13, %14 : vector<1x256xf32>
    %16 = arith.subf %10, %15 : vector<1x256xf32>
    %17 = arith.addf %13, %4 : vector<1x256xf32>
    %cst_6 = arith.constant 1.06666672 : f32
    %18 = vector.broadcast %cst_6 : f32 to vector<1x256xf32>
    %19 = arith.mulf %17, %18 : vector<1x256xf32>
    %cst_7 = arith.constant 5.000000e-01 : f32
    %20 = vector.broadcast %cst_7 : f32 to vector<1x256xf32>
    %21 = arith.subf %19, %20 : vector<1x256xf32>
    %22 = arith.addf %16, %5 : vector<1x256xf32>
    %cst_8 = arith.constant 1.06666672 : f32
    %23 = vector.broadcast %cst_8 : f32 to vector<1x256xf32>
    %24 = arith.mulf %22, %23 : vector<1x256xf32>
    %cst_9 = arith.constant 5.000000e-01 : f32
    %25 = vector.broadcast %cst_9 : f32 to vector<1x256xf32>
    %26 = arith.subf %24, %25 : vector<1x256xf32>
    %27 = math.floor %21 : vector<1x256xf32>
    %28 = math.floor %26 : vector<1x256xf32>
    %29 = arith.subf %21, %27 : vector<1x256xf32>
    %30 = arith.subf %26, %28 : vector<1x256xf32>
    %cst_10 = arith.constant 1.000000e+00 : f32
    %31 = vector.broadcast %cst_10 : f32 to vector<1x256xf32>
    %32 = arith.addf %27, %31 : vector<1x256xf32>
    %cst_11 = arith.constant 1.000000e+00 : f32
    %33 = vector.broadcast %cst_11 : f32 to vector<1x256xf32>
    %34 = arith.subf %33, %29 : vector<1x256xf32>
    %cst_12 = arith.constant 0.000000e+00 : f32
    %35 = vector.broadcast %cst_12 : f32 to vector<1x256xf32>
    %36 = arith.cmpf oge, %27, %35 : vector<1x256xf32>
    %cst_13 = arith.constant 1.500000e+01 : f32
    %37 = vector.broadcast %cst_13 : f32 to vector<1x256xf32>
    %38 = arith.cmpf ole, %27, %37 : vector<1x256xf32>
    %39 = arith.andi %36, %38 : vector<1x256xi1>
    %cst_14 = arith.constant 0.000000e+00 : f32
    %40 = vector.broadcast %cst_14 : f32 to vector<1x256xf32>
    %41 = arith.cmpf oge, %32, %40 : vector<1x256xf32>
    %cst_15 = arith.constant 1.500000e+01 : f32
    %42 = vector.broadcast %cst_15 : f32 to vector<1x256xf32>
    %43 = arith.cmpf ole, %32, %42 : vector<1x256xf32>
    %44 = arith.andi %41, %43 : vector<1x256xi1>
    %cst_16 = arith.constant 0.000000e+00 : f32
    %45 = vector.broadcast %cst_16 : f32 to vector<1x256xf32>
    %46 = arith.select %39, %34, %45 : vector<1x256xi1>, vector<1x256xf32>
    %cst_17 = arith.constant 0.000000e+00 : f32
    %47 = vector.broadcast %cst_17 : f32 to vector<1x256xf32>
    %48 = arith.select %44, %29, %47 : vector<1x256xi1>, vector<1x256xf32>
    %cst_18 = arith.constant 0.000000e+00 : f32
    %cst_19 = arith.constant 1.500000e+01 : f32
    %49 = vector.broadcast %cst_18 : f32 to vector<1x256xf32>
    %50 = arith.maximumf %49, %27 : vector<1x256xf32>
    %51 = vector.broadcast %cst_19 : f32 to vector<1x256xf32>
    %52 = arith.minimumf %51, %50 : vector<1x256xf32>
    %53 = arith.fptosi %52 : vector<1x256xf32> to vector<1x256xi32>
    %cst_20 = arith.constant 0.000000e+00 : f32
    %cst_21 = arith.constant 1.500000e+01 : f32
    %54 = vector.broadcast %cst_20 : f32 to vector<1x256xf32>
    %55 = arith.maximumf %54, %32 : vector<1x256xf32>
    %56 = vector.broadcast %cst_21 : f32 to vector<1x256xf32>
    %57 = arith.minimumf %56, %55 : vector<1x256xf32>
    %58 = arith.fptosi %57 : vector<1x256xf32> to vector<1x256xi32>
    %59 = tpu.iota {dimensions = array<i32: 0>} : vector<16x256xi32>
    %60 = vector.broadcast %53 : vector<1x256xi32> to vector<16x256xi32>
    %61 = arith.cmpi eq, %59, %60 : vector<16x256xi32>
    %cst_22 = arith.constant 0.000000e+00 : f32
    %62 = vector.shape_cast %46 : vector<1x256xf32> to vector<1x256xf32>
    %63 = vector.broadcast %62 : vector<1x256xf32> to vector<16x256xf32>
    %64 = vector.broadcast %cst_22 : f32 to vector<16x256xf32>
    %65 = arith.select %61, %63, %64 : vector<16x256xi1>, vector<16x256xf32>
    %66 = vector.broadcast %58 : vector<1x256xi32> to vector<16x256xi32>
    %67 = arith.cmpi eq, %59, %66 : vector<16x256xi32>
    %cst_23 = arith.constant 0.000000e+00 : f32
    %68 = vector.shape_cast %48 : vector<1x256xf32> to vector<1x256xf32>
    %69 = vector.broadcast %68 : vector<1x256xf32> to vector<16x256xf32>
    %70 = vector.broadcast %cst_23 : f32 to vector<16x256xf32>
    %71 = arith.select %67, %69, %70 : vector<16x256xi1>, vector<16x256xf32>
    %72 = arith.addf %65, %71 : vector<16x256xf32>
    %cst_24 = arith.constant 1.000000e+00 : f32
    %73 = vector.broadcast %cst_24 : f32 to vector<1x256xf32>
    %74 = arith.addf %28, %73 : vector<1x256xf32>
    %cst_25 = arith.constant 1.000000e+00 : f32
    %75 = vector.broadcast %cst_25 : f32 to vector<1x256xf32>
    %76 = arith.subf %75, %30 : vector<1x256xf32>
    %cst_26 = arith.constant 0.000000e+00 : f32
    %77 = vector.broadcast %cst_26 : f32 to vector<1x256xf32>
    %78 = arith.cmpf oge, %28, %77 : vector<1x256xf32>
    %cst_27 = arith.constant 1.500000e+01 : f32
    %79 = vector.broadcast %cst_27 : f32 to vector<1x256xf32>
    %80 = arith.cmpf ole, %28, %79 : vector<1x256xf32>
    %81 = arith.andi %78, %80 : vector<1x256xi1>
    %cst_28 = arith.constant 0.000000e+00 : f32
    %82 = vector.broadcast %cst_28 : f32 to vector<1x256xf32>
    %83 = arith.cmpf oge, %74, %82 : vector<1x256xf32>
    %cst_29 = arith.constant 1.500000e+01 : f32
    %84 = vector.broadcast %cst_29 : f32 to vector<1x256xf32>
    %85 = arith.cmpf ole, %74, %84 : vector<1x256xf32>
    %86 = arith.andi %83, %85 : vector<1x256xi1>
    %cst_30 = arith.constant 0.000000e+00 : f32
    %87 = vector.broadcast %cst_30 : f32 to vector<1x256xf32>
    %88 = arith.select %81, %76, %87 : vector<1x256xi1>, vector<1x256xf32>
    %cst_31 = arith.constant 0.000000e+00 : f32
    %89 = vector.broadcast %cst_31 : f32 to vector<1x256xf32>
    %90 = arith.select %86, %30, %89 : vector<1x256xi1>, vector<1x256xf32>
    %cst_32 = arith.constant 0.000000e+00 : f32
    %cst_33 = arith.constant 1.500000e+01 : f32
    %91 = vector.broadcast %cst_32 : f32 to vector<1x256xf32>
    %92 = arith.maximumf %91, %28 : vector<1x256xf32>
    %93 = vector.broadcast %cst_33 : f32 to vector<1x256xf32>
    %94 = arith.minimumf %93, %92 : vector<1x256xf32>
    %95 = arith.fptosi %94 : vector<1x256xf32> to vector<1x256xi32>
    %cst_34 = arith.constant 0.000000e+00 : f32
    %cst_35 = arith.constant 1.500000e+01 : f32
    %96 = vector.broadcast %cst_34 : f32 to vector<1x256xf32>
    %97 = arith.maximumf %96, %74 : vector<1x256xf32>
    %98 = vector.broadcast %cst_35 : f32 to vector<1x256xf32>
    %99 = arith.minimumf %98, %97 : vector<1x256xf32>
    %100 = arith.fptosi %99 : vector<1x256xf32> to vector<1x256xi32>
    %101 = tpu.iota {dimensions = array<i32: 0>} : vector<16x256xi32>
    %102 = vector.broadcast %95 : vector<1x256xi32> to vector<16x256xi32>
    %103 = arith.cmpi eq, %101, %102 : vector<16x256xi32>
    %cst_36 = arith.constant 0.000000e+00 : f32
    %104 = vector.shape_cast %88 : vector<1x256xf32> to vector<1x256xf32>
    %105 = vector.broadcast %104 : vector<1x256xf32> to vector<16x256xf32>
    %106 = vector.broadcast %cst_36 : f32 to vector<16x256xf32>
    %107 = arith.select %103, %105, %106 : vector<16x256xi1>, vector<16x256xf32>
    %108 = vector.broadcast %100 : vector<1x256xi32> to vector<16x256xi32>
    %109 = arith.cmpi eq, %101, %108 : vector<16x256xi32>
    %cst_37 = arith.constant 0.000000e+00 : f32
    %110 = vector.shape_cast %90 : vector<1x256xf32> to vector<1x256xf32>
    %111 = vector.broadcast %110 : vector<1x256xf32> to vector<16x256xf32>
    %112 = vector.broadcast %cst_37 : f32 to vector<16x256xf32>
    %113 = arith.select %109, %111, %112 : vector<16x256xi1>, vector<16x256xf32>
    %114 = arith.addf %107, %113 : vector<16x256xf32>
    %115 = vector.shape_cast %72 : vector<16x256xf32> to vector<16x1x256xf32>
    %116 = vector.shape_cast %114 : vector<16x256xf32> to vector<1x16x256xf32>
    %117 = vector.broadcast %115 : vector<16x1x256xf32> to vector<16x16x256xf32>
    %118 = vector.broadcast %116 : vector<1x16x256xf32> to vector<16x16x256xf32>
    %119 = arith.mulf %117, %118 : vector<16x16x256xf32>
    %120 = vector.shape_cast %119 : vector<16x16x256xf32> to vector<256x256xf32>
    %cst_38 = arith.constant dense<0.000000e+00> : vector<4x256xf32>
    %121 = tpu.matmul %1, %120, %cst_38 {dimension_numbers = #tpu.dot_dimension_numbers<[1], [0], [0], [1], [0, 0, 1, 1], [], []>} : vector<4x256xf32>, vector<256x256xf32>, vector<4x256xf32> -> vector<4x256xf32>
    %c0_39 = arith.constant 0 : index
    %c0_40 = arith.constant 0 : index
    %c0_41 = arith.constant 0 : index
    %122 = vector.load %arg4[%c0_39, %c0_40, %c0_41] : memref<1x4x256xf32, #tpu.memory_space<vmem>>, vector<1x4x256xf32>
    %123 = vector.shape_cast %122 : vector<1x4x256xf32> to vector<4x256xf32>
    %124 = vector.shape_cast %121 : vector<4x256xf32> to vector<1x4x256xf32>
    tpu.vector_store %arg4[%c0_39, %c0_40, %c0_41], %124 {strides = array<i32>} : memref<1x4x256xf32, #tpu.memory_space<vmem>>, vector<1x4x256xf32>,
    return
  }
  func.func @transform_0(%arg0: i32, %arg1: i32) -> (i32, i32, i32) {
    %c0_i32 = arith.constant 0 : i32
    %c0_i32_0 = arith.constant 0 : i32
    %c0_i32_1 = arith.constant 0 : i32
    return %arg0, %c0_i32, %c0_i32_0 : i32, i32, i32
  }
  func.func @transform_1(%arg0: i32, %arg1: i32) -> (i32, i32, i32) {
    %c0_i32 = arith.constant 0 : i32
    %c0_i32_0 = arith.constant 0 : i32
    return %arg0, %c0_i32, %arg1 : i32, i32, i32
  }
  func.func @transform_2(%arg0: i32, %arg1: i32) -> (i32, i32, i32) {
    %c0_i32 = arith.constant 0 : i32
    %c0_i32_0 = arith.constant 0 : i32
    return %arg0, %c0_i32, %arg1 : i32, i32, i32
  }
}

</mosaic_0001>

<llo_original>
// kernel: tpu_custom_call.1
$region0: #{tpu_custom_call.1}
  #allocation0 [shape = 'u32[]', space=smem, size = 0x4, offset = 0x4, fixed_abs, tag = 'smem constant byte address 0x4 - core index']
  #allocation1 [shape = 'u32[144,128]{1,0:T(1,128)}', space=vmem, size = 0x12000, scoped, tag = 'internal scratch']
  %s0 = inlined_call_operand.hbm [shape: f32[2,4,256], index: 0, kind: input, shape index: {}]
  %s1 = inlined_call_operand.hbm [shape: f32[2,2,256], index: 1, kind: input, shape index: {}]
  %s2 = inlined_call_operand.hbm [shape: f32[2,4,256], index: 2, kind: output, shape index: {}]
  %s3 = sld [smem:[#allocation0]]
  $region49: #{tpu_custom_call.1} parent=0
    _
  %s5 = ssub.s32 1, %s3
  %s6 = scalar_select 0, %s5, %s3
  $region1: #{tpu_custom_call.1} parent=0
    #allocation2 [shape = 'u8[8192]{0}', space=vmem, size = 0x2000, scoped, tag = 'input window, operand 0']
    #allocation3 [shape = 's32[2]{0}', space=sflag, size = 0x8, scoped, tag = 'scoped memory for tpu_custom_call.1']
    #allocation4 [shape = 's32[2]{0}', space=sflag, size = 0x8, scoped, tag = 'scoped memory for tpu_custom_call.1']
    #allocation5 [shape = 'u8[4096]{0}', space=vmem, size = 0x1000, scoped, tag = 'input window, operand 1']
    #allocation6 [shape = 's32[2]{0}', space=sflag, size = 0x8, scoped, tag = 'scoped memory for tpu_custom_call.1']
    #allocation7 [shape = 'u8[8192]{0}', space=vmem, size = 0x2000, scoped, tag = 'output window, operand 0']
    %7 = vsyncpa [#allocation3], 0
    %s8 = scalar_lea.sflag [#allocation3], 1
    %9 = vsyncpa %s8, 0
    %10 = vsyncpa [#allocation6], 0
    %s11 = scalar_lea.sflag [#allocation6], 1
    %12 = vsyncpa %s11, 0
    %13 = vsyncpa [#allocation4], 0
    %s14 = scalar_lea.sflag [#allocation4], 1
    %15 = vsyncpa %s14, 0
    loop: start=0, step=1, limit=4
    $region2: #{tpu_custom_call.1} parent=1 // loop_pre_header
      _
    $region3: #{tpu_custom_call.1} parent=1 // loop_header
      %s17 = sphi 0, %s21
      %p18 = scmp.ge.s32.totalorder %s17, 4
      %s24 = sphi 0, %s36
      %s25 = sphi 0, %s32
      %s26 = sphi 0, %s24
      %s27 = sphi 0, %s25
      %s28 = sphi 0, %s26
      %s29 = sphi 0, %s27
      %s39 = sphi 0, %s41
      %s42 = sphi 0, %s39
      %s43 = sphi 0, %s42
      %s59 = sphi 0, %s43
      %s67 = sphi 0, %s69
      %s70 = sphi 0, %s67
      %s71 = sphi 0, %s70
      %s87 = sphi 0, %s71
      %s95 = sphi 0, %s97
      %s98 = sphi 0, %s95
      %s99 = sphi 0, %s98
      %s115 = sphi 0, %s99
    $region4: #{tpu_custom_call.1} parent=1 // loop_header_branch
      %20 = sbr.rel (%p18) target = $region8
    $region5: #{tpu_custom_call.1} parent=1 // loop_body
      %s22 = ssub.s32 %s17, 1
      %s23 = ssub.s32 %s17, 2
      %s30 = sadd.s32 1, %s25
      %p31 = scmp.ge.s32.totalorder %s30, 1
      %s32 = scalar_select %p31, 0, %s30
      %s33 = sadd.s32 1, %s24
      %s34 = scalar_select %p31, %s33, %s24
      %p35 = scmp.ge.s32.totalorder %s34, 2
      %s36 = scalar_select %p35, 0, %s34
      %s37 = ssub.s32 %s24, %s36
      %p38 = scmp.eq.s32.totalorder %s37, 0
      %s40 = sadd.s32 %s39, 1
      %s41 = scalar_select %p38, %s39, %s40
      %p44 = pneg %p38
      %p45 = scmp.eq.s32.totalorder %s17, 1
      %p46 = por %p44, %p45
      %p47 = scmp.ne.s32.totalorder %s39, %s42
      %p48 = scmp.eq.s32.totalorder %s17, 0
      %p49 = por %p47, %p48
      %p50 = scmp.ne.s32.totalorder %s39, %s42
      %p51 = scmp.eq.s32.totalorder %s22, 1
      %p52 = por %p50, %p51
      %p53 = scmp.ne.s32.totalorder %s42, %s43
      %p54 = scmp.eq.s32.totalorder %s22, 0
      %p55 = por %p53, %p54
      %p56 = scmp.ne.s32.totalorder %s42, %s43
      %p57 = scmp.eq.s32.totalorder %s23, 1
      %p58 = por %p56, %p57
      %p60 = scmp.ne.s32.totalorder %s43, %s59
      %p61 = scmp.eq.s32.totalorder %s23, 0
      %p62 = por %p60, %p61
      %s63 = ssub.s32 %s24, %s36
      %s64 = ssub.s32 %s25, %s32
      %s65 = sor.u32 %s63, %s64
      %p66 = scmp.eq.s32.totalorder %s65, 0
      %s68 = sadd.s32 %s67, 1
      %s69 = scalar_select %p66, %s67, %s68
      %p72 = pneg %p66
      %p73 = scmp.eq.s32.totalorder %s17, 1
      %p74 = por %p72, %p73
      %p75 = scmp.ne.s32.totalorder %s67, %s70
      %p76 = scmp.eq.s32.totalorder %s17, 0
      %p77 = por %p75, %p76
      %p78 = scmp.ne.s32.totalorder %s67, %s70
      %p79 = scmp.eq.s32.totalorder %s22, 1
      %p80 = por %p78, %p79
      %p81 = scmp.ne.s32.totalorder %s70, %s71
      %p82 = scmp.eq.s32.totalorder %s22, 0
      %p83 = por %p81, %p82
      %p84 = scmp.ne.s32.totalorder %s70, %s71
      %p85 = scmp.eq.s32.totalorder %s23, 1
      %p86 = por %p84, %p85
      %p88 = scmp.ne.s32.totalorder %s71, %s87
      %p89 = scmp.eq.s32.totalorder %s23, 0
      %p90 = por %p88, %p89
      %s91 = ssub.s32 %s24, %s36
      %s92 = ssub.s32 %s25, %s32
      %s93 = sor.u32 %s91, %s92
      %p94 = scmp.eq.s32.totalorder %s93, 0
      %s96 = sadd.s32 %s95, 1
      %s97 = scalar_select %p94, %s95, %s96
      %p100 = pneg %p94
      %p101 = scmp.eq.s32.totalorder %s17, 1
      %p102 = por %p100, %p101
      %p103 = scmp.ne.s32.totalorder %s95, %s98
      %p104 = scmp.eq.s32.totalorder %s17, 0
      %p105 = por %p103, %p104
      %p106 = scmp.ne.s32.totalorder %s95, %s98
      %p107 = scmp.eq.s32.totalorder %s22, 1
      %p108 = por %p106, %p107
      %p109 = scmp.ne.s32.totalorder %s98, %s99
      %p110 = scmp.eq.s32.totalorder %s22, 0
      %p111 = por %p109, %p110
      %p112 = scmp.ne.s32.totalorder %s98, %s99
      %p113 = scmp.eq.s32.totalorder %s23, 1
      %p114 = por %p112, %p113
      %p116 = scmp.ne.s32.totalorder %s99, %s115
      %p117 = scmp.eq.s32.totalorder %s23, 0
      %p118 = por %p116, %p117
      %p119 = scmp.le.s32.totalorder 1, %s17
      %p120 = scmp.lt.s32.totalorder %s17, 3
      %p121 = pnand %p119, %p120
      %p122 = pneg %p121
      // Predicated region
      $region9: #{tpu_custom_call.1} parent=5 // pred_check
        _
      $region10: #{tpu_custom_call.1} parent=5 // pred_check_branch
        %124 = sbr.rel (%p121) target = $region12
      $region11: #{tpu_custom_call.1} parent=5 // pred_region
        %s125 = ssub.s32 %s17, 1
      $region12: #{tpu_custom_call.1} parent=5 // pred_fallthru
        _
      %p126 = scmp.lt.s32.totalorder %s17, 2
      // Predicated region
      $region13: #{tpu_custom_call.1} parent=5 // pred_check
        %p127 = pneg %p126
      $region14: #{tpu_custom_call.1} parent=5 // pred_check_branch
        %129 = sbr.rel (%p127) target = $region16
      $region15: #{tpu_custom_call.1} parent=5 // pred_region
        // Predicated region
        $region17: #{tpu_custom_call.1} parent=15 // pred_check
          %p130 = pneg %p49
        $region18: #{tpu_custom_call.1} parent=15 // pred_check_branch
          %132 = sbr.rel (%p130) target = $region20
        $region19: #{tpu_custom_call.1} parent=15 // pred_region
          %s133 = sand.u32 %s39, 1
          %s134 = scalar_lea.sflag [#allocation3], %s133
          %s135 = sand.u32 %s39, 1
          %s136 = smul.addr %s135, 8
          %s137 = scalar_lea.vmem [#allocation2], %s136
          %s139 = ssub.s32 128, 128
          %140 = vsyncadd %s134, %s139
          %s141 = smul.addr %s24, 2
          %s142 = smul.addr %s141, 64
          %s143 = scalar_lea.hbm %s0, %s142
          %s145 = sshll.u32 %s137, 4
          %s146 = int_to_ptr.vmem [resolvable:$true] %s145
          %148 = dma.hbm_to_vmem [thread:$0]  %s143, 128, %s146, %s134
        $region20: #{tpu_custom_call.1} parent=15 // pred_fallthru
          _
        // Predicated region
        $region21: #{tpu_custom_call.1} parent=15 // pred_check
          %p149 = pneg %p77
        $region22: #{tpu_custom_call.1} parent=15 // pred_check_branch
          %151 = sbr.rel (%p149) target = $region24
        $region23: #{tpu_custom_call.1} parent=15 // pred_region
          %s152 = sand.u32 %s67, 1
          %s153 = scalar_lea.sflag [#allocation6], %s152
          %s154 = sand.u32 %s67, 1
          %s155 = smul.addr %s154, 4
          %s156 = scalar_lea.vmem [#allocation5], %s155
          %s157 = smul.u32 2, %s25
          %s159 = ssub.s32 64, 64
          %160 = vsyncadd %s153, %s159
          %s161 = smul.addr %s24, 2
          %s162 = sadd.s32 %s157, %s161
          %s163 = smul.addr %s162, 32
          %s164 = scalar_lea.hbm %s1, %s163
          %s166 = sshll.u32 %s156, 4
          %s167 = int_to_ptr.vmem [resolvable:$true] %s166
          %169 = dma.hbm_to_vmem [thread:$0]  %s164, 64, %s167, %s153
        $region24: #{tpu_custom_call.1} parent=15 // pred_fallthru
          _
      $region16: #{tpu_custom_call.1} parent=5 // pred_fallthru
        _
      %p170 = scmp.le.s32.totalorder 1, %s17
      %p171 = scmp.lt.s32.totalorder %s17, 3
      %p172 = pnand %p170, %p171
      %p173 = pneg %p172
      // Predicated region
      $region25: #{tpu_custom_call.1} parent=5 // pred_check
        _
      $region26: #{tpu_custom_call.1} parent=5 // pred_check_branch
        %175 = sbr.rel (%p172) target = $region28
      $region27: #{tpu_custom_call.1} parent=5 // pred_region
        %s176 = ssub.s32 %s17, 1
        %s177 = sand.u32 %s42, 1
        %s178 = scalar_lea.sflag [#allocation3], %s177
        %s179 = sand.u32 %s42, 1
        %s180 = smul.addr %s179, 8
        %s181 = scalar_lea.vmem [#allocation2], %s180
        // Predicated region
        $region29: #{tpu_custom_call.1} parent=27 // pred_check
          %p182 = pneg %p55
        $region30: #{tpu_custom_call.1} parent=27 // pred_check_branch
          %184 = sbr.rel (%p182) target = $region32
        $region31: #{tpu_custom_call.1} parent=27 // pred_region
          %185 = dma.done %s178, 128
        $region32: #{tpu_custom_call.1} parent=27 // pred_fallthru
          _
        %s186 = sand.u32 %s70, 1
        %s187 = scalar_lea.sflag [#allocation6], %s186
        %s188 = sand.u32 %s70, 1
        %s189 = smul.addr %s188, 4
        %s190 = scalar_lea.vmem [#allocation5], %s189
        // Predicated region
        $region33: #{tpu_custom_call.1} parent=27 // pred_check
          %p191 = pneg %p83
        $region34: #{tpu_custom_call.1} parent=27 // pred_check_branch
          %193 = sbr.rel (%p191) target = $region36
        $region35: #{tpu_custom_call.1} parent=27 // pred_region
          %194 = dma.done %s187, 64
        $region36: #{tpu_custom_call.1} parent=27 // pred_fallthru
          _
        %s195 = sand.u32 %s42, 1
        %s196 = scalar_lea.sflag [#allocation3], %s195
        %s197 = sand.u32 %s42, 1
        %s198 = smul.addr %s197, 8
        %s199 = scalar_lea.vmem [#allocation2], %s198
        %p200 = pneg %p55
        %p201 = pneg %p52
        %s202 = sand.u32 %s70, 1
        %s203 = scalar_lea.sflag [#allocation6], %s202
        %s204 = sand.u32 %s70, 1
        %s205 = smul.addr %s204, 4
        %s206 = scalar_lea.vmem [#allocation5], %s205
        %p207 = pneg %p83
        %p208 = pneg %p80
        %p209 = pneg %p111
        %p210 = pneg %p108
        %s211 = sand.u32 %s98, 1
        %s212 = scalar_lea.sflag [#allocation4], %s211
        %s213 = sand.u32 %s98, 1
        %s214 = smul.addr %s213, 8
        %s215 = scalar_lea.vmem [#allocation7], %s214
        %s216 = smul.u32 2, %s27
        %s217 = smul.u32 2, %s27
        %v218 = vld [vmem:[%s181] sm:$0xff]
        %v219 = vld [vmem:[%s190] sm:$0xf]
        %s220 = smul.u32 %s27, 256
        %v221 = vlaneseq
        %v222 = vand.u32 %v221, 127
        %v223 = vadd.s32 %v222, 128
        %v224 = vstv %s220
        %v225 = vadd.s32 %v224, %v222
        %v226 = vadd.s32 %v224, %v223
        %v227 = vcvt.s32.f32 %v225
        %v228 = vcvt.s32.f32 %v226
        %v229 = vrcp.pop 16.0
        %v230 = vmul.f32 %v227, %v229
        %v231 = vmul.f32 %v228, %v229
        %v232 = vfloor.f32 %v230
        %v233 = vfloor.f32 %v231
        %v234 = vmul.f32 %v232, 16.0
        %v235 = vmul.f32 %v233, 16.0
        %v236 = vsub.f32 %v227, %v234
        %v237 = vsub.f32 %v228, %v235
        %v239 = vlaneseq
        %v240 = vshrl.u32 %v239, 7
        %v241 = vsub.s32 0, %v240
        %v242 = vrot.slane %v219, %v241
        %v243 = vlaneseq
        %v244 = vshrl.u32 %v243, 7
        %v245 = vsub.s32 2, %v244
        %v246 = vrot.slane %v219, %v245
        %v249 = vadd.f32 %v232, %v242
        %v250 = vadd.f32 %v233, %v246
        %v251 = vmul.f32 %v249, 1.0666667
        %v252 = vmul.f32 %v250, 1.0666667
        %v253 = vsub.f32 %v251, 0.5
        %v254 = vsub.f32 %v252, 0.5
        %v255 = vlaneseq
        %v256 = vshrl.u32 %v255, 7
        %v257 = vsub.s32 1, %v256
        %v258 = vrot.slane %v219, %v257
        %v259 = vlaneseq
        %v260 = vshrl.u32 %v259, 7
        %v261 = vsub.s32 3, %v260
        %v262 = vrot.slane %v219, %v261
        %v265 = vadd.f32 %v236, %v258
        %v266 = vadd.f32 %v237, %v262
        %v267 = vmul.f32 %v265, 1.0666667
        %v268 = vmul.f32 %v266, 1.0666667
        %v269 = vsub.f32 %v267, 0.5
        %v270 = vsub.f32 %v268, 0.5
        %v271 = vfloor.f32 %v253
        %v272 = vfloor.f32 %v254
        %v273 = vfloor.f32 %v269
        %v274 = vfloor.f32 %v270
        %v275 = vsub.f32 %v253, %v271
        %v276 = vsub.f32 %v254, %v272
        %v277 = vsub.f32 %v269, %v273
        %v278 = vsub.f32 %v270, %v274
        %v279 = vadd.f32 %v271, 1.0
        %v280 = vadd.f32 %v272, 1.0
        %v281 = vsub.f32 1.0, %v275
        %v282 = vsub.f32 1.0, %v276
        %vm283 = vcmp.ge.f32.partialorder %v271, 0.0
        %vm284 = vcmp.ge.f32.partialorder %v272, 0.0
        %vm285 = vcmp.le.f32.partialorder %v271, 15.0
        %vm286 = vcmp.le.f32.partialorder %v272, 15.0
        %vm287 = vmand %vm283, %vm285
        %vm288 = vmand %vm284, %vm286
        %vm289 = vcmp.ge.f32.partialorder %v279, 0.0
        %vm290 = vcmp.ge.f32.partialorder %v280, 0.0
        %vm291 = vcmp.le.f32.partialorder %v279, 15.0
        %vm292 = vcmp.le.f32.partialorder %v280, 15.0
        %vm293 = vmand %vm289, %vm291
        %vm294 = vmand %vm290, %vm292
        %v295 = vsel %vm287, %v281, 0.0
        %v296 = vsel %vm288, %v282, 0.0
        %v297 = vsel %vm293, %v275, 0.0
        %v298 = vsel %vm294, %v276, 0.0
        %v299 = vmax.f32 %v271, 0.0
        %v300 = vmax.f32 %v272, 0.0
        %v301 = vmin.f32 %v299, 15.0
        %v302 = vmin.f32 %v300, 15.0
        %v303 = vcvt.f32.s32.to.zero.pseudo %v301
        %v304 = vcvt.f32.s32.to.zero.pseudo %v302
        %v305 = vmax.f32 %v279, 0.0
        %v306 = vmax.f32 %v280, 0.0
        %v307 = vmin.f32 %v305, 15.0
        %v308 = vmin.f32 %v306, 15.0
        %v309 = vcvt.f32.s32.to.zero.pseudo %v307
        %v310 = vcvt.f32.s32.to.zero.pseudo %v308
        %v311 = vlaneseq
        %v312 = vshrl.u32 %v311, 7
        %v313 = vadd.s32 %v312, 8
        %v314 = vlaneseq
        %v315 = vshrl.u32 %v314, 7
        %v316 = vsub.s32 0, %v315
        %v317 = vrot.slane %v303, %v316
        %v318 = vlaneseq
        %v319 = vshrl.u32 %v318, 7
        %v320 = vsub.s32 0, %v319
        %v321 = vrot.slane %v304, %v320
        %vm322 = vcmp.eq.s32.totalorder %v312, %v317
        %vm323 = vcmp.eq.s32.totalorder %v312, %v321
        %vm324 = vcmp.eq.s32.totalorder %v313, %v317
        %vm325 = vcmp.eq.s32.totalorder %v313, %v321
        %v326 = vlaneseq
        %v327 = vshrl.u32 %v326, 7
        %v328 = vsub.s32 0, %v327
        %v329 = vrot.slane %v295, %v328
        %v330 = vlaneseq
        %v331 = vshrl.u32 %v330, 7
        %v332 = vsub.s32 0, %v331
        %v333 = vrot.slane %v296, %v332
        %v334 = vsel %vm322, %v329, 0.0
        %v335 = vsel %vm323, %v333, 0.0
        %v336 = vsel %vm324, %v329, 0.0
        %v337 = vsel %vm325, %v333, 0.0
        %v338 = vlaneseq
        %v339 = vshrl.u32 %v338, 7
        %v340 = vsub.s32 0, %v339
        %v341 = vrot.slane %v309, %v340
        %v342 = vlaneseq
        %v343 = vshrl.u32 %v342, 7
        %v344 = vsub.s32 0, %v343
        %v345 = vrot.slane %v310, %v344
        %vm346 = vcmp.eq.s32.totalorder %v312, %v341
        %vm347 = vcmp.eq.s32.totalorder %v312, %v345
        %vm348 = vcmp.eq.s32.totalorder %v313, %v341
        %vm349 = vcmp.eq.s32.totalorder %v313, %v345
        %v350 = vlaneseq
        %v351 = vshrl.u32 %v350, 7
        %v352 = vsub.s32 0, %v351
        %v353 = vrot.slane %v297, %v352
        %v354 = vlaneseq
        %v355 = vshrl.u32 %v354, 7
        %v356 = vsub.s32 0, %v355
        %v357 = vrot.slane %v298, %v356
        %v358 = vsel %vm346, %v353, 0.0
        %v359 = vsel %vm347, %v357, 0.0
        %v360 = vsel %vm348, %v353, 0.0
        %v361 = vsel %vm349, %v357, 0.0
        %v362 = vadd.f32 %v334, %v358
        %v363 = vadd.f32 %v335, %v359
        %v364 = vadd.f32 %v336, %v360
        %v365 = vadd.f32 %v337, %v361
        %v366 = vadd.f32 %v273, 1.0
        %v367 = vadd.f32 %v274, 1.0
        %v368 = vsub.f32 1.0, %v277
        %v369 = vsub.f32 1.0, %v278
        %vm370 = vcmp.ge.f32.partialorder %v273, 0.0
        %vm371 = vcmp.ge.f32.partialorder %v274, 0.0
        %vm372 = vcmp.le.f32.partialorder %v273, 15.0
        %vm373 = vcmp.le.f32.partialorder %v274, 15.0
        %vm374 = vmand %vm370, %vm372
        %vm375 = vmand %vm371, %vm373
        %vm376 = vcmp.ge.f32.partialorder %v366, 0.0
        %vm377 = vcmp.ge.f32.partialorder %v367, 0.0
        %vm378 = vcmp.le.f32.partialorder %v366, 15.0
        %vm379 = vcmp.le.f32.partialorder %v367, 15.0
        %vm380 = vmand %vm376, %vm378
        %vm381 = vmand %vm377, %vm379
        %v382 = vsel %vm374, %v368, 0.0
        %v383 = vsel %vm375, %v369, 0.0
        %v384 = vsel %vm380, %v277, 0.0
        %v385 = vsel %vm381, %v278, 0.0
        %v386 = vmax.f32 %v273, 0.0
        %v387 = vmax.f32 %v274, 0.0
        %v388 = vmin.f32 %v386, 15.0
        %v389 = vmin.f32 %v387, 15.0
        %v390 = vcvt.f32.s32.to.zero.pseudo %v388
        %v391 = vcvt.f32.s32.to.zero.pseudo %v389
        %v392 = vmax.f32 %v366, 0.0
        %v393 = vmax.f32 %v367, 0.0
        %v394 = vmin.f32 %v392, 15.0
        %v395 = vmin.f32 %v393, 15.0
        %v396 = vcvt.f32.s32.to.zero.pseudo %v394
        %v397 = vcvt.f32.s32.to.zero.pseudo %v395
        %v398 = vlaneseq
        %v399 = vshrl.u32 %v398, 7
        %v400 = vsub.s32 0, %v399
        %v401 = vrot.slane %v390, %v400
        %v402 = vlaneseq
        %v403 = vshrl.u32 %v402, 7
        %v404 = vsub.s32 0, %v403
        %v405 = vrot.slane %v391, %v404
        %vm406 = vcmp.eq.s32.totalorder %v312, %v401
        %vm407 = vcmp.eq.s32.totalorder %v312, %v405
        %vm408 = vcmp.eq.s32.totalorder %v313, %v401
        %vm409 = vcmp.eq.s32.totalorder %v313, %v405
        %v410 = vlaneseq
        %v411 = vshrl.u32 %v410, 7
        %v412 = vsub.s32 0, %v411
        %v413 = vrot.slane %v382, %v412
        %v414 = vlaneseq
        %v415 = vshrl.u32 %v414, 7
        %v416 = vsub.s32 0, %v415
        %v417 = vrot.slane %v383, %v416
        %v418 = vsel %vm406, %v413, 0.0
        %v419 = vsel %vm407, %v417, 0.0
        %v420 = vsel %vm408, %v413, 0.0
        %v421 = vsel %vm409, %v417, 0.0
        %v422 = vlaneseq
        %v423 = vshrl.u32 %v422, 7
        %v424 = vsub.s32 0, %v423
        %v425 = vrot.slane %v396, %v424
        %v426 = vlaneseq
        %v427 = vshrl.u32 %v426, 7
        %v428 = vsub.s32 0, %v427
        %v429 = vrot.slane %v397, %v428
        %vm430 = vcmp.eq.s32.totalorder %v312, %v425
        %vm431 = vcmp.eq.s32.totalorder %v312, %v429
        %vm432 = vcmp.eq.s32.totalorder %v313, %v425
        %vm433 = vcmp.eq.s32.totalorder %v313, %v429
        %v434 = vlaneseq
        %v435 = vshrl.u32 %v434, 7
        %v436 = vsub.s32 0, %v435
        %v437 = vrot.slane %v384, %v436
        %v438 = vlaneseq
        %v439 = vshrl.u32 %v438, 7
        %v440 = vsub.s32 0, %v439
        %v441 = vrot.slane %v385, %v440
        %v442 = vsel %vm430, %v437, 0.0
        %v443 = vsel %vm431, %v441, 0.0
        %v444 = vsel %vm432, %v437, 0.0
        %v445 = vsel %vm433, %v441, 0.0
        %v446 = vadd.f32 %v418, %v442
        %v447 = vadd.f32 %v419, %v443
        %v448 = vadd.f32 %v420, %v444
        %v449 = vadd.f32 %v421, %v445
        %v454 = vcombine.low %v362, %v363
        %v455 = vcombine.high %v362, %v363
        %v457 = vunpack.c.l.s4 1966171168
        %v458 = vunpack.c.0.s8 %v457
        %v459 = vlaneseq
        %v460 = vshrl.u32 %v459, 7
        %v461 = vsub.s32 %v458, %v460
        %v462 = vrot.slane %v454, %v461
        %v464 = vunpack.c.l.s4 1966171168
        %v465 = vunpack.c.0.s8 %v464
        %v466 = vlaneseq
        %v467 = vshrl.u32 %v466, 7
        %v468 = vsub.s32 %v465, %v467
        %v469 = vrot.slane %v455, %v468
        %v470 = vcombine.high %v462, %v462
        %v471 = vcombine.high %v469, %v469
        %v473 = vunpack.c.l.s4 1966171168
        %v474 = vunpack.c.0.s8 %v473
        %v475 = vlaneseq
        %v476 = vshrl.u32 %v475, 7
        %v477 = vsub.s32 %v474, %v476
        %v478 = vrot.slane %v462, %v477
        %v480 = vunpack.c.l.s4 1966171168
        %v481 = vunpack.c.0.s8 %v480
        %v482 = vlaneseq
        %v483 = vshrl.u32 %v482, 7
        %v484 = vsub.s32 %v481, %v483
        %v485 = vrot.slane %v469, %v484
        %v487 = vunpack.c.l.s4 1966171168
        %v488 = vunpack.c.0.s8 %v487
        %v489 = vlaneseq
        %v490 = vshrl.u32 %v489, 7
        %v491 = vsub.s32 %v488, %v490
        %v492 = vrot.slane %v470, %v491
        %v494 = vunpack.c.l.s4 1966171168
        %v495 = vunpack.c.0.s8 %v494
        %v496 = vlaneseq
        %v497 = vshrl.u32 %v496, 7
        %v498 = vsub.s32 %v495, %v497
        %v499 = vrot.slane %v471, %v498
        %v500 = vcombine.high %v478, %v478
        %v501 = vcombine.high %v485, %v485
        %v502 = vcombine.high %v492, %v492
        %v503 = vcombine.high %v499, %v499
        %v504 = vcombine.low %v364, %v365
        %v505 = vcombine.high %v364, %v365
        %v507 = vunpack.c.l.s4 1966171168
        %v508 = vunpack.c.0.s8 %v507
        %v509 = vlaneseq
        %v510 = vshrl.u32 %v509, 7
        %v511 = vsub.s32 %v508, %v510
        %v512 = vrot.slane %v504, %v511
        %v514 = vunpack.c.l.s4 1966171168
        %v515 = vunpack.c.0.s8 %v514
        %v516 = vlaneseq
        %v517 = vshrl.u32 %v516, 7
        %v518 = vsub.s32 %v515, %v517
        %v519 = vrot.slane %v505, %v518
        %v520 = vcombine.high %v512, %v512
        %v521 = vcombine.high %v519, %v519
        %v523 = vunpack.c.l.s4 1966171168
        %v524 = vunpack.c.0.s8 %v523
        %v525 = vlaneseq
        %v526 = vshrl.u32 %v525, 7
        %v527 = vsub.s32 %v524, %v526
        %v528 = vrot.slane %v512, %v527
        %v530 = vunpack.c.l.s4 1966171168
        %v531 = vunpack.c.0.s8 %v530
        %v532 = vlaneseq
        %v533 = vshrl.u32 %v532, 7
        %v534 = vsub.s32 %v531, %v533
        %v535 = vrot.slane %v519, %v534
        %v537 = vunpack.c.l.s4 1966171168
        %v538 = vunpack.c.0.s8 %v537
        %v539 = vlaneseq
        %v540 = vshrl.u32 %v539, 7
        %v541 = vsub.s32 %v538, %v540
        %v542 = vrot.slane %v520, %v541
        %v544 = vunpack.c.l.s4 1966171168
        %v545 = vunpack.c.0.s8 %v544
        %v546 = vlaneseq
        %v547 = vshrl.u32 %v546, 7
        %v548 = vsub.s32 %v545, %v547
        %v549 = vrot.slane %v521, %v548
        %v550 = vcombine.high %v528, %v528
        %v551 = vcombine.high %v535, %v535
        %v552 = vcombine.high %v542, %v542
        %v553 = vcombine.high %v549, %v549
        %v554 = vlaneseq
        %v555 = vshrl.u32 %v554, 7
        %v556 = vsub.s32 0, %v555
        %v557 = vrot.slane %v478, %v556
        %v558 = vlaneseq
        %v559 = vshrl.u32 %v558, 7
        %v560 = vsub.s32 1, %v559
        %v561 = vrot.slane %v478, %v560
        %v562 = vlaneseq
        %v563 = vshrl.u32 %v562, 7
        %v564 = vsub.s32 0, %v563
        %v565 = vrot.slane %v492, %v564
        %v566 = vlaneseq
        %v567 = vshrl.u32 %v566, 7
        %v568 = vsub.s32 1, %v567
        %v569 = vrot.slane %v492, %v568
        %v570 = vlaneseq
        %v571 = vshrl.u32 %v570, 7
        %v572 = vsub.s32 0, %v571
        %v573 = vrot.slane %v500, %v572
        %v574 = vlaneseq
        %v575 = vshrl.u32 %v574, 7
        %v576 = vsub.s32 1, %v575
        %v577 = vrot.slane %v500, %v576
        %v578 = vlaneseq
        %v579 = vshrl.u32 %v578, 7
        %v580 = vsub.s32 0, %v579
        %v581 = vrot.slane %v502, %v580
        %v582 = vlaneseq
        %v583 = vshrl.u32 %v582, 7
        %v584 = vsub.s32 1, %v583
        %v585 = vrot.slane %v502, %v584
        %v586 = vlaneseq
        %v587 = vshrl.u32 %v586, 7
        %v588 = vsub.s32 0, %v587
        %v589 = vrot.slane %v485, %v588
        %v590 = vlaneseq
        %v591 = vshrl.u32 %v590, 7
        %v592 = vsub.s32 1, %v591
        %v593 = vrot.slane %v485, %v592
        %v594 = vlaneseq
        %v595 = vshrl.u32 %v594, 7
        %v596 = vsub.s32 0, %v595
        %v597 = vrot.slane %v499, %v596
        %v598 = vlaneseq
        %v599 = vshrl.u32 %v598, 7
        %v600 = vsub.s32 1, %v599
        %v601 = vrot.slane %v499, %v600
        %v602 = vlaneseq
        %v603 = vshrl.u32 %v602, 7
        %v604 = vsub.s32 0, %v603
        %v605 = vrot.slane %v501, %v604
        %v606 = vlaneseq
        %v607 = vshrl.u32 %v606, 7
        %v608 = vsub.s32 1, %v607
        %v609 = vrot.slane %v501, %v608
        %v610 = vlaneseq
        %v611 = vshrl.u32 %v610, 7
        %v612 = vsub.s32 0, %v611
        %v613 = vrot.slane %v503, %v612
        %v614 = vlaneseq
        %v615 = vshrl.u32 %v614, 7
        %v616 = vsub.s32 1, %v615
        %v617 = vrot.slane %v503, %v616
        %v618 = vlaneseq
        %v619 = vshrl.u32 %v618, 7
        %v620 = vsub.s32 0, %v619
        %v621 = vrot.slane %v528, %v620
        %v622 = vlaneseq
        %v623 = vshrl.u32 %v622, 7
        %v624 = vsub.s32 1, %v623
        %v625 = vrot.slane %v528, %v624
        %v626 = vlaneseq
        %v627 = vshrl.u32 %v626, 7
        %v628 = vsub.s32 0, %v627
        %v629 = vrot.slane %v542, %v628
        %v630 = vlaneseq
        %v631 = vshrl.u32 %v630, 7
        %v632 = vsub.s32 1, %v631
        %v633 = vrot.slane %v542, %v632
        %v634 = vlaneseq
        %v635 = vshrl.u32 %v634, 7
        %v636 = vsub.s32 0, %v635
        %v637 = vrot.slane %v550, %v636
        %v638 = vlaneseq
        %v639 = vshrl.u32 %v638, 7
        %v640 = vsub.s32 1, %v639
        %v641 = vrot.slane %v550, %v640
        %v642 = vlaneseq
        %v643 = vshrl.u32 %v642, 7
        %v644 = vsub.s32 0, %v643
        %v645 = vrot.slane %v552, %v644
        %v646 = vlaneseq
        %v647 = vshrl.u32 %v646, 7
        %v648 = vsub.s32 1, %v647
        %v649 = vrot.slane %v552, %v648
        %v650 = vlaneseq
        %v651 = vshrl.u32 %v650, 7
        %v652 = vsub.s32 0, %v651
        %v653 = vrot.slane %v535, %v652
        %v654 = vlaneseq
        %v655 = vshrl.u32 %v654, 7
        %v656 = vsub.s32 1, %v655
        %v657 = vrot.slane %v535, %v656
        %v658 = vlaneseq
        %v659 = vshrl.u32 %v658, 7
        %v660 = vsub.s32 0, %v659
        %v661 = vrot.slane %v549, %v660
        %v662 = vlaneseq
        %v663 = vshrl.u32 %v662, 7
        %v664 = vsub.s32 1, %v663
        %v665 = vrot.slane %v549, %v664
        %v666 = vlaneseq
        %v667 = vshrl.u32 %v666, 7
        %v668 = vsub.s32 0, %v667
        %v669 = vrot.slane %v551, %v668
        %v670 = vlaneseq
        %v671 = vshrl.u32 %v670, 7
        %v672 = vsub.s32 1, %v671
        %v673 = vrot.slane %v551, %v672
        %v674 = vlaneseq
        %v675 = vshrl.u32 %v674, 7
        %v676 = vsub.s32 0, %v675
        %v677 = vrot.slane %v553, %v676
        %v678 = vlaneseq
        %v679 = vshrl.u32 %v678, 7
        %v680 = vsub.s32 1, %v679
        %v681 = vrot.slane %v553, %v680
        %v714 = vmul.f32 %v557, %v446
        %v715 = vmul.f32 %v561, %v447
        %v716 = vmul.f32 %v557, %v448
        %v717 = vmul.f32 %v561, %v449
        %v718 = vmul.f32 %v565, %v446
        %v719 = vmul.f32 %v569, %v447
        %v720 = vmul.f32 %v565, %v448
        %v721 = vmul.f32 %v569, %v449
        %v722 = vmul.f32 %v573, %v446
        %v723 = vmul.f32 %v577, %v447
        %v724 = vmul.f32 %v573, %v448
        %v725 = vmul.f32 %v577, %v449
        %v726 = vmul.f32 %v581, %v446
        %v727 = vmul.f32 %v585, %v447
        %v728 = vmul.f32 %v581, %v448
        %v729 = vmul.f32 %v585, %v449
        %v730 = vmul.f32 %v589, %v446
        %v731 = vmul.f32 %v593, %v447
        %v732 = vmul.f32 %v589, %v448
        %v733 = vmul.f32 %v593, %v449
        %v734 = vmul.f32 %v597, %v446
        %v735 = vmul.f32 %v601, %v447
        %v736 = vmul.f32 %v597, %v448
        %v737 = vmul.f32 %v601, %v449
        %v738 = vmul.f32 %v605, %v446
        %v739 = vmul.f32 %v609, %v447
        %v740 = vmul.f32 %v605, %v448
        %v741 = vmul.f32 %v609, %v449
        %v742 = vmul.f32 %v613, %v446
        %v743 = vmul.f32 %v617, %v447
        %v744 = vmul.f32 %v613, %v448
        %v745 = vmul.f32 %v617, %v449
        %v746 = vmul.f32 %v621, %v446
        %v747 = vmul.f32 %v625, %v447
        %v748 = vmul.f32 %v621, %v448
        %v749 = vmul.f32 %v625, %v449
        %v750 = vmul.f32 %v629, %v446
        %v751 = vmul.f32 %v633, %v447
        %v752 = vmul.f32 %v629, %v448
        %v753 = vmul.f32 %v633, %v449
        %v754 = vmul.f32 %v637, %v446
        %v755 = vmul.f32 %v641, %v447
        %v756 = vmul.f32 %v637, %v448
        %v757 = vmul.f32 %v641, %v449
        %v758 = vmul.f32 %v645, %v446
        %v759 = vmul.f32 %v649, %v447
        %v760 = vmul.f32 %v645, %v448
        %v761 = vmul.f32 %v649, %v449
        %v762 = vmul.f32 %v653, %v446
        %v763 = vmul.f32 %v657, %v447
        %v764 = vmul.f32 %v653, %v448
        %v765 = vmul.f32 %v657, %v449
        %v766 = vmul.f32 %v661, %v446
        %v767 = vmul.f32 %v665, %v447
        %v768 = vmul.f32 %v661, %v448
        %v769 = vmul.f32 %v665, %v449
        %v770 = vmul.f32 %v669, %v446
        %v771 = vmul.f32 %v673, %v447
        %v772 = vmul.f32 %v669, %v448
        %v773 = vmul.f32 %v673, %v449
        %v774 = vmul.f32 %v677, %v446
        %v775 = vmul.f32 %v681, %v447
        %v776 = vmul.f32 %v677, %v448
        %v777 = vmul.f32 %v681, %v449
        %v779 = vcombine.high %v218, %v218
        %781 = vmatprep.subr.mxu0 %v715
        %782 = vmatpush1.msra.mxu0 %v714
        %783 = vmatprep.subr.mxu0 %v717
        %784 = vmatpush1.msra.mxu0 %v716
        %785 = vmatprep.subr.mxu0 %v719
        %786 = vmatpush1.msra.mxu0 %v718
        %787 = vmatprep.subr.mxu0 %v721
        %788 = vmatpush1.msra.mxu0 %v720
        %789 = vmatprep.subr.mxu0 %v723
        %790 = vmatpush1.msra.mxu0 %v722
        %791 = vmatprep.subr.mxu0 %v725
        %792 = vmatpush1.msra.mxu0 %v724
        %793 = vmatprep.subr.mxu0 %v727
        %794 = vmatpush1.msra.mxu0 %v726
        %795 = vmatprep.subr.mxu0 %v729
        %796 = vmatpush1.msra.mxu0 %v728
        %797 = vmatprep.subr.mxu0 %v731
        %798 = vmatpush1.msra.mxu0 %v730
        %799 = vmatprep.subr.mxu0 %v733
        %800 = vmatpush1.msra.mxu0 %v732
        %801 = vmatprep.subr.mxu0 %v735
        %802 = vmatpush1.msra.mxu0 %v734
        %803 = vmatprep.subr.mxu0 %v737
        %804 = vmatpush1.msra.mxu0 %v736
        %805 = vmatprep.subr.mxu0 %v739
        %806 = vmatpush1.msra.mxu0 %v738
        %807 = vmatprep.subr.mxu0 %v741
        %808 = vmatpush1.msra.mxu0 %v740
        %809 = vmatprep.subr.mxu0 %v743
        %810 = vmatpush1.msra.mxu0 %v742
        %811 = vmatprep.subr.mxu0 %v745
        %812 = vmatpush1.msra.mxu0 %v744
        %813 = vmatprep.subr.mxu0 %v747
        %814 = vmatpush1.msra.mxu0 %v746
        %815 = vmatprep.subr.mxu0 %v749
        %816 = vmatpush1.msra.mxu0 %v748
        %817 = vmatprep.subr.mxu0 %v751
        %818 = vmatpush1.msra.mxu0 %v750
        %819 = vmatprep.subr.mxu0 %v753
        %820 = vmatpush1.msra.mxu0 %v752
        %821 = vmatprep.subr.mxu0 %v755
        %822 = vmatpush1.msra.mxu0 %v754
        %823 = vmatprep.subr.mxu0 %v757
        %824 = vmatpush1.msra.mxu0 %v756
        %825 = vmatprep.subr.mxu0 %v759
        %826 = vmatpush1.msra.mxu0 %v758
        %827 = vmatprep.subr.mxu0 %v761
        %828 = vmatpush1.msra.mxu0 %v760
        %829 = vmatprep.subr.mxu0 %v763
        %830 = vmatpush1.msra.mxu0 %v762
        %831 = vmatprep.subr.mxu0 %v765
        %832 = vmatpush1.msra.mxu0 %v764
        %833 = vmatprep.subr.mxu0 %v767
        %834 = vmatpush1.msra.mxu0 %v766
        %835 = vmatprep.subr.mxu0 %v769
        %836 = vmatpush1.msra.mxu0 %v768
        %837 = vmatprep.subr.mxu0 %v771
        %838 = vmatpush1.msra.mxu0 %v770
        %839 = vmatprep.subr.mxu0 %v773
        %840 = vmatpush1.msra.mxu0 %v772
        %841 = vmatprep.subr.mxu0 %v775
        %842 = vmatpush1.msra.mxu0 %v774
        %843 = vmatprep.subr.mxu0 %v777
        %844 = vmatpush1.msra.mxu0 %v776
        %845 = vmatprep.mubr.f32.mxu0 %v779
        %846 = vmatmul.mubr.f32.gmra.mrb[0].mxu0 %v218
        %v847 = vpop.f32.mrb[0].mxu0
        %v848 = vadd.f32 0.0, %v847
        %v849 = vpop.f32.mrb[0].mxu0
        %v850 = vadd.f32 0.0, %v849
        %851 = vdwg.mxu0
        %v854 = vcombine.low %v848, %v850
        %856 = vst [vmem:[%s215] sm:$0xff] %v854
        %s857 = sand.u32 %s98, 1
        %s858 = scalar_lea.sflag [#allocation4], %s857
        %s859 = sand.u32 %s98, 1
        %s860 = smul.addr %s859, 8
        %s861 = scalar_lea.vmem [#allocation7], %s860
        // Predicated region
        $region37: #{tpu_custom_call.1} parent=27 // pred_check
          %p862 = pneg %p108
        $region38: #{tpu_custom_call.1} parent=27 // pred_check_branch
          %864 = sbr.rel (%p862) target = $region40
        $region39: #{tpu_custom_call.1} parent=27 // pred_region
          %s865 = smul.u32 2, %s27
          %s867 = ssub.s32 128, 128
          %868 = vsyncadd %s858, %s867
          %s869 = smul.addr %s26, 2
          %s870 = sadd.s32 %s865, %s869
          %s871 = smul.addr %s870, 64
          %s872 = scalar_lea.hbm %s2, %s871
          %s874 = sshll.u32 %s861, 4
          %s875 = int_to_ptr.vmem [resolvable:$true] %s874
          %877 = dma.vmem_to_hbm [thread:$0]  %s875, 128, %s872, %s858
        $region40: #{tpu_custom_call.1} parent=27 // pred_fallthru
          _
      $region28: #{tpu_custom_call.1} parent=5 // pred_fallthru
        _
      %p878 = scmp.le.s32.totalorder 2, %s17
      // Predicated region
      $region41: #{tpu_custom_call.1} parent=5 // pred_check
        %p879 = pneg %p878
      $region42: #{tpu_custom_call.1} parent=5 // pred_check_branch
        %881 = sbr.rel (%p879) target = $region44
      $region43: #{tpu_custom_call.1} parent=5 // pred_region
        %s882 = ssub.s32 %s17, 2
        // Predicated region
        $region45: #{tpu_custom_call.1} parent=43 // pred_check
          %p883 = pneg %p114
        $region46: #{tpu_custom_call.1} parent=43 // pred_check_branch
          %885 = sbr.rel (%p883) target = $region48
        $region47: #{tpu_custom_call.1} parent=43 // pred_region
          %s886 = sand.u32 %s99, 1
          %s887 = scalar_lea.sflag [#allocation4], %s886
          %s888 = sand.u32 %s99, 1
          %s889 = smul.addr %s888, 8
          %s890 = scalar_lea.vmem [#allocation7], %s889
          %891 = dma.done %s887, 128
        $region48: #{tpu_custom_call.1} parent=43 // pred_fallthru
          _
      $region44: #{tpu_custom_call.1} parent=5 // pred_fallthru
        _
    $region6: #{tpu_custom_call.1} parent=1 // loop_footer
      %s21 = sadd.s32 1, %s17
    $region7: #{tpu_custom_call.1} parent=1 // loop_footer_branch
      %16 = sbr.rel target = $region3
    $region8: #{tpu_custom_call.1} parent=1 // loop_exit
      _
    %892 = vsyncpa [#allocation3], 1
    %s893 = scalar_lea.sflag [#allocation3], 1
    %894 = vsyncpa %s893, 1
    %895 = vsyncpa [#allocation6], 1
    %s896 = scalar_lea.sflag [#allocation6], 1
    %897 = vsyncpa %s896, 1
    %898 = vsyncpa [#allocation4], 1
    %s899 = scalar_lea.sflag [#allocation4], 1
    %900 = vsyncpa %s899, 1

</llo_original>
